<compile_context>
chip_gen: v7x
topology: tpu7x:2x2x1
jax: 0.10.0
libtpu: 0.0.40
codegen_flags: <defaults>
</compile_context>

<pallas_src>
import jax
import jax.numpy as jnp
from jax.experimental import pallas as pl
from jax.experimental.pallas import tpu as pltpu

LANES = 128
SUBLANES = 8
MAX_BLOCK_ROWS = 4096   # (4096,128) f32 block = 2 MiB/input/buffer; sweepable
CHUNK_ROWS = 1024       # in-kernel processing granularity (bounds vreg/spill pressure)


def _default_core_splits() -> int:
    """2-way grid split only on 2-TensorCore chips (v7x); 1 elsewhere."""
    try:
        kind = jax.devices()[0].device_kind.lower()
    except Exception:
        return 1
    return 2 if ("v7" in kind or "7x" in kind) else 1


def center_loss(center_map_pred: jax.Array, center_map_gt: jax.Array, *,
                max_block_rows: int = MAX_BLOCK_ROWS,
                binary_targets: bool = False,
                core_splits: int | None = None) -> jax.Array:
    """BCE loss with reduction='sum' over 1-D inputs of shape (n,)."""
    assert center_map_pred.shape == center_map_gt.shape
    assert center_map_pred.ndim == 1
    n = center_map_pred.shape[0]          # static Python int
    assert n >= 1

    nc = core_splits if core_splits is not None else _default_core_splits()

    # --- Tiling: balance blocks so padding stays tiny, then zero-pad exactly. -------
    rows_needed = pl.cdiv(n, LANES)
    blocks_needed = pl.cdiv(rows_needed, max_block_rows)
    nc_eff = nc if blocks_needed >= nc else 1
    steps_per_c = pl.cdiv(blocks_needed, nc_eff)
    total_blocks = nc_eff * steps_per_c
    # Multiple of 16 so bf16-packed sublane slicing stays aligned too.
    row_tile = pl.cdiv(pl.cdiv(rows_needed, total_blocks), 16) * 16
    rows = total_blocks * row_tile
    n_pad = rows * LANES                  # zero pad contributes exactly 0 loss

    def prep(x):
        # Keep caller dtype (bf16 streams as bf16 -> half HBM bytes); f32 cast in-kernel.
        if n_pad != n:
            x = jnp.pad(x, (0, n_pad - n))
        return x.reshape(rows, LANES)     # row-major reshape, layout-free

    pred2d = prep(center_map_pred)
    gt2d = prep(center_map_gt)

    chunk_rows = min(CHUNK_ROWS, row_tile)
    n_full = row_tile // chunk_rows       # >= 1
    rem = row_tile - n_full * chunk_rows  # multiple of 16 (possibly 0)

    def in_map(c, i):
        return (c * steps_per_c + i, 0)

    def kernel(pred_ref, gt_ref, acc_ref):
        @pl.when(pl.program_id(1) == 0)
        def _():
            acc_ref[...] = jnp.zeros_like(acc_ref)

        def chunk_partial(p_raw, y_raw):
            p = p_raw.astype(jnp.float32)
            y = y_raw.astype(jnp.float32)
            if binary_targets:
                # Single-log variant for hard {0,1} labels (halves EUP pushes).
                elem = jnp.maximum(jnp.log(jnp.where(y > 0.5, p, 1.0 - p)), -100.0)
            else:
                log_p = jnp.maximum(jnp.log(p), -100.0)        # PyTorch clamps at -100
                log_1mp = jnp.maximum(jnp.log1p(-p), -100.0)
                # -(y*log_p + (1-y)*log_1mp) == -(log_1mp + y*(log_p - log_1mp));
                # the negation is folded into the wrapper.
                elem = log_1mp + y * (log_p - log_1mp)
            # Layout-free vreg regrouping + major-axis sum into the (8,128) accumulator.
            return jnp.sum(elem.reshape(-1, SUBLANES, LANES), axis=0)

        if n_full == 1 and rem == 0:
            acc_ref[...] += chunk_partial(pred_ref[...], gt_ref[...])
        else:
            @pl.loop(0, n_full)
            def _(j):
                r0 = pl.multiple_of(j * chunk_rows, chunk_rows)
                acc_ref[...] += chunk_partial(pred_ref[pl.ds(r0, chunk_rows), :],
                                              gt_ref[pl.ds(r0, chunk_rows), :])
            if rem > 0:
                r0 = n_full * chunk_rows
                acc_ref[...] += chunk_partial(pred_ref[pl.ds(r0, rem), :],
                                              gt_ref[pl.ds(r0, rem), :])

    itemsize = center_map_pred.dtype.itemsize
    cost = pl.CostEstimate(
        flops=8 * n_pad,
        transcendentals=(1 if binary_targets else 2) * n_pad,
        bytes_accessed=2 * n_pad * itemsize + nc_eff * SUBLANES * LANES * 4,
    )

    partial = pl.pallas_call(
        kernel,
        out_shape=jax.ShapeDtypeStruct((nc_eff * SUBLANES, LANES), jnp.float32),
        grid_spec=pltpu.PrefetchScalarGridSpec(
            num_scalar_prefetch=0,
            grid=(nc_eff, steps_per_c),
            in_specs=[pl.BlockSpec((row_tile, LANES), in_map),
                      pl.BlockSpec((row_tile, LANES), in_map)],
            out_specs=pl.BlockSpec((SUBLANES, LANES), lambda c, i: (c, 0)),
        ),
        compiler_params=pltpu.CompilerParams(
            dimension_semantics=("parallel", "arbitrary"),
            vmem_limit_bytes=32 * 1024 * 1024),
        cost_estimate=cost,
    )(pred2d, gt2d)

    # Sign fold + final cross-lane reduce happens once, outside the kernel.
    return -jnp.sum(partial)


def _reference_bce_sum(pred, gt):
    p = pred.astype(jnp.float32)
    y = gt.astype(jnp.float32)
    log_p = jnp.maximum(jnp.log(p), -100.0)
    log_1mp = jnp.maximum(jnp.log1p(-p), -100.0)
    return jnp.sum(-(y * log_p + (1.0 - y) * log_1mp))


if __name__ == "__main__":
    key = jax.random.PRNGKey(0)
    k1, k2, k3, k4, k5, k6 = jax.random.split(key, 6)

    # Test 1: small 1-D center map (e.g. flattened 10x10 heatmap), hard labels, defaults.
    n1 = 100
    pred1 = jax.nn.sigmoid(jax.random.normal(k1, (n1,), jnp.float32))
    gt1 = (jax.random.uniform(k2, (n1,)) > 0.5).astype(jnp.float32)
    out1 = jax.block_until_ready(center_loss(pred1, gt1))
    ref1 = _reference_bce_sum(pred1, gt1)
    assert jnp.allclose(out1, ref1, rtol=1e-5, atol=1e-4), (out1, ref1)

    # Test 2: soft targets, tiny block size + forced 2-way core split to exercise the
    # (parallel, arbitrary) grid, multi-step accumulation, and zero-pad blocks.
    n2 = 2500
    pred2 = jax.nn.sigmoid(jax.random.normal(k3, (n2,), jnp.float32))
    gt2 = jax.random.uniform(k4, (n2,), jnp.float32)
    out2 = jax.block_until_ready(center_loss(pred2, gt2, max_block_rows=8,
                                             core_splits=2))
    ref2 = _reference_bce_sum(pred2, gt2)
    assert jnp.allclose(out2, ref2, rtol=1e-5, atol=1e-3), (out2, ref2)

    # Test 3: moderate size exercising the in-kernel chunk loop + static tail remainder.
    n3 = 300000
    pred3 = jax.nn.sigmoid(jax.random.normal(k5, (n3,), jnp.float32))
    gt3 = jax.random.uniform(k6, (n3,), jnp.float32)
    out3 = jax.block_until_ready(center_loss(pred3, gt3))
    ref3 = _reference_bce_sum(pred3, gt3)
    assert jnp.allclose(out3, ref3, rtol=1e-4, atol=1e-1), (out3, ref3)

    # Test 4: single-log binary-target fast path with hard labels.
    out4 = jax.block_until_ready(center_loss(pred1, gt1, binary_targets=True))
    assert jnp.allclose(out4, ref1, rtol=1e-5, atol=1e-3), (out4, ref1)

    print("KERNEL_OK")
</pallas_src>

<mosaic_0001>
module attributes {stable_mosaic.version = 11 : i64} {
  func.func @kernel(%arg0: i32, %arg1: i32, %arg2: memref<16x128xf32, #tpu.memory_space<vmem>>, %arg3: memref<16x128xf32, #tpu.memory_space<vmem>>, %arg4: memref<8x128xf32, #tpu.memory_space<vmem>>) attributes {dimension_semantics = [#tpu.dimension_semantics<parallel>, #tpu.dimension_semantics<arbitrary>], iteration_bounds = array<i64: 1, 1>, scalar_prefetch = 0 : i64, scratch_operands = 0 : i64, tpu.core_type = #tpu.core_type<tc>, window_params = [{transform_indices = @transform_0, window_bounds = array<i64: 16, 128>}, {transform_indices = @transform_1, window_bounds = array<i64: 16, 128>}, {transform_indices = @transform_2, window_bounds = array<i64: 8, 128>}]} {
    %c0_i32 = arith.constant 0 : i32
    %0 = arith.cmpi eq, %arg1, %c0_i32 : i32
    %1 = arith.extui %0 : i1 to i32
    %c0_i32_0 = arith.constant 0 : i32
    %2 = arith.cmpi ne, %1, %c0_i32_0 : i32
    scf.if %2 {
      %cst_11 = arith.constant 0.000000e+00 : f32
      %21 = vector.broadcast %cst_11 : f32 to vector<8x128xf32>
      %c0_12 = arith.constant 0 : index
      %c0_13 = arith.constant 0 : index
      %22 = vector.load %arg4[%c0_12, %c0_13] : memref<8x128xf32, #tpu.memory_space<vmem>>, vector<8x128xf32>
      tpu.vector_store %arg4[%c0_12, %c0_13], %21 {strides = array<i32>} : memref<8x128xf32, #tpu.memory_space<vmem>>, vector<8x128xf32>,
    } else {
    }
    %c0 = arith.constant 0 : index
    %c0_1 = arith.constant 0 : index
    %3 = vector.load %arg4[%c0, %c0_1] : memref<8x128xf32, #tpu.memory_space<vmem>>, vector<8x128xf32>
    %c0_2 = arith.constant 0 : index
    %c0_3 = arith.constant 0 : index
    %4 = vector.load %arg2[%c0_2, %c0_3] : memref<16x128xf32, #tpu.memory_space<vmem>>, vector<16x128xf32>
    %c0_4 = arith.constant 0 : index
    %c0_5 = arith.constant 0 : index
    %5 = vector.load %arg3[%c0_4, %c0_5] : memref<16x128xf32, #tpu.memory_space<vmem>>, vector<16x128xf32>
    %6 = math.log %4 : vector<16x128xf32>
    %cst = arith.constant -1.000000e+02 : f32
    %7 = vector.broadcast %cst : f32 to vector<16x128xf32>
    %8 = arith.maximumf %6, %7 : vector<16x128xf32>
    %cst_6 = arith.constant 0.000000e+00 : f32
    %9 = vector.broadcast %cst_6 : f32 to vector<16x128xf32>
    %10 = arith.subf %9, %4 : vector<16x128xf32>
    %11 = math.log1p %10 : vector<16x128xf32>
    %cst_7 = arith.constant -1.000000e+02 : f32
    %12 = vector.broadcast %cst_7 : f32 to vector<16x128xf32>
    %13 = arith.maximumf %11, %12 : vector<16x128xf32>
    %14 = arith.subf %8, %13 : vector<16x128xf32>
    %15 = arith.mulf %5, %14 : vector<16x128xf32>
    %16 = arith.addf %13, %15 : vector<16x128xf32>
    %17 = vector.shape_cast %16 : vector<16x128xf32> to vector<2x8x128xf32>
    %cst_8 = arith.constant dense<0.000000e+00> : vector<8x128xf32>
    %18 = vector.multi_reduction <add>, %17, %cst_8 [0] : vector<2x8x128xf32> to vector<8x128xf32>
    %19 = arith.addf %3, %18 : vector<8x128xf32>
    %c0_9 = arith.constant 0 : index
    %c0_10 = arith.constant 0 : index
    %20 = vector.load %arg4[%c0_9, %c0_10] : memref<8x128xf32, #tpu.memory_space<vmem>>, vector<8x128xf32>
    tpu.vector_store %arg4[%c0_9, %c0_10], %19 {strides = array<i32>} : memref<8x128xf32, #tpu.memory_space<vmem>>, vector<8x128xf32>,
    return
  }
  func.func @transform_0(%arg0: i32, %arg1: i32) -> (i32, i32) {
    %c1_i32 = arith.constant 1 : i32
    %0 = arith.muli %arg0, %c1_i32 : i32
    %1 = arith.addi %0, %arg1 : i32
    %c0_i32 = arith.constant 0 : i32
    %c0_i32_0 = arith.constant 0 : i32
    return %1, %c0_i32 : i32, i32
  }
  func.func @transform_1(%arg0: i32, %arg1: i32) -> (i32, i32) {
    %c1_i32 = arith.constant 1 : i32
    %0 = arith.muli %arg0, %c1_i32 : i32
    %1 = arith.addi %0, %arg1 : i32
    %c0_i32 = arith.constant 0 : i32
    %c0_i32_0 = arith.constant 0 : i32
    return %1, %c0_i32 : i32, i32
  }
  func.func @transform_2(%arg0: i32, %arg1: i32) -> (i32, i32) {
    %c0_i32 = arith.constant 0 : i32
    %c0_i32_0 = arith.constant 0 : i32
    return %arg0, %c0_i32 : i32, i32
  }
}

</mosaic_0001>

<llo_original>
// kernel: tpu_custom_call.1
$region0: #{tpu_custom_call.1}
  #allocation0 [shape = 'u32[]', space=smem, size = 0x4, offset = 0x4, fixed_abs, tag = 'smem constant byte address 0x4 - core index']
  #allocation1 [shape = 'u32[144,128]{1,0:T(1,128)}', space=vmem, size = 0x12000, scoped, tag = 'internal scratch']
  %s0 = inlined_call_operand.hbm [shape: f32[16,128], index: 0, kind: input, shape index: {}]
  %s1 = inlined_call_operand.hbm [shape: f32[16,128], index: 1, kind: input, shape index: {}]
  %s2 = inlined_call_operand.hbm [shape: f32[8,128], index: 2, kind: output, shape index: {}]
  %s3 = sld [smem:[#allocation0]]
  $region30: #{tpu_custom_call.1} parent=0
    _
  %s5 = ssub.s32 1, %s3
  %s6 = scalar_select 0, %s5, %s3
  $region1: #{tpu_custom_call.1} parent=0
    #allocation2 [shape = 'u8[8192]{0}', space=vmem, size = 0x2000, scoped, tag = 'input window, operand 0, single buffered']
    #allocation3 [shape = 's32[1]{0}', space=sflag, size = 0x4, scoped, tag = 'scoped memory for tpu_custom_call.1']
    #allocation4 [shape = 's32[1]{0}', space=sflag, size = 0x4, scoped, tag = 'scoped memory for tpu_custom_call.1']
    #allocation5 [shape = 'u8[8192]{0}', space=vmem, size = 0x2000, scoped, tag = 'input window, operand 1, single buffered']
    #allocation6 [shape = 's32[1]{0}', space=sflag, size = 0x4, scoped, tag = 'scoped memory for tpu_custom_call.1']
    #allocation7 [shape = 'u8[4096]{0}', space=vmem, size = 0x1000, scoped, tag = 'output window, operand 0, single buffered']
    %7 = vsyncpa [#allocation3], 0
    %8 = vsyncpa [#allocation6], 0
    %9 = vsyncpa [#allocation4], 0
    // Predicated region
    $region2: #{tpu_custom_call.1} parent=1 // pred_check
      _
    $region3: #{tpu_custom_call.1} parent=1 // pred_check_branch
      %11 = sbr.rel (0) target = $region5
    $region4: #{tpu_custom_call.1} parent=1 // pred_region
      %s12 = sadd.s32 0, 0
      %s13 = smul.u32 2, %s12
      %s15 = ssub.s32 256, 256
      %16 = vsyncadd [#allocation3], %s15
      %s17 = smul.addr %s13, 128
      %s18 = scalar_lea.hbm %s0, %s17
      %s19 = sshll.u32 [#allocation2], 4
      %s20 = int_to_ptr.vmem [resolvable:$true] %s19
      %25 = dma.hbm_to_vmem [thread:$0]  %s18, 256, %s20, [#allocation3], 128, 128, 8
    $region5: #{tpu_custom_call.1} parent=1 // pred_fallthru
      _
    // Predicated region
    $region6: #{tpu_custom_call.1} parent=1 // pred_check
      _
    $region7: #{tpu_custom_call.1} parent=1 // pred_check_branch
      %27 = sbr.rel (0) target = $region9
    $region8: #{tpu_custom_call.1} parent=1 // pred_region
      %s28 = sadd.s32 0, 0
      %s29 = smul.u32 2, %s28
      %s31 = ssub.s32 256, 256
      %32 = vsyncadd [#allocation6], %s31
      %s33 = smul.addr %s29, 128
      %s34 = scalar_lea.hbm %s1, %s33
      %s35 = sshll.u32 [#allocation5], 4
      %s36 = int_to_ptr.vmem [resolvable:$true] %s35
      %41 = dma.hbm_to_vmem [thread:$0]  %s34, 256, %s36, [#allocation6], 128, 128, 8
    $region9: #{tpu_custom_call.1} parent=1 // pred_fallthru
      _
    // Predicated region
    $region10: #{tpu_custom_call.1} parent=1 // pred_check
      _
    $region11: #{tpu_custom_call.1} parent=1 // pred_check_branch
      %43 = sbr.rel (0) target = $region13
    $region12: #{tpu_custom_call.1} parent=1 // pred_region
      %44 = dma.done [#allocation3], 256
    $region13: #{tpu_custom_call.1} parent=1 // pred_fallthru
      _
    // Predicated region
    $region14: #{tpu_custom_call.1} parent=1 // pred_check
      _
    $region15: #{tpu_custom_call.1} parent=1 // pred_check_branch
      %46 = sbr.rel (0) target = $region17
    $region16: #{tpu_custom_call.1} parent=1 // pred_region
      %47 = dma.done [#allocation6], 256
    $region17: #{tpu_custom_call.1} parent=1 // pred_fallthru
      _
    %s48 = sadd.s32 0, 0
    %s49 = smul.u32 2, %s48
    %s50 = sadd.s32 0, 0
    %s51 = smul.u32 2, %s50
    %p52 = scmp.eq.s32.totalorder 0, 0
    // Predicated region
    $region18: #{tpu_custom_call.1} parent=1 // pred_check
      %p53 = pneg %p52
    $region19: #{tpu_custom_call.1} parent=1 // pred_check_branch
      %55 = sbr.rel (%p53) target = $region21
    $region20: #{tpu_custom_call.1} parent=1 // pred_region
      %56 = vst [vmem:[#allocation7] sm:$0xff] 0.0
    $region21: #{tpu_custom_call.1} parent=1 // pred_fallthru
      _
    %v57 = vld [vmem:[#allocation7] sm:$0xff]
    %v58 = vld [vmem:[#allocation2] sm:$0xff]
    %v59 = vld [vmem:[#allocation2 + $0x8] sm:$0xff]
    %v60 = vld [vmem:[#allocation5] sm:$0xff]
    %v61 = vld [vmem:[#allocation5 + $0x8] sm:$0xff]
    %v62 = vlog2.pop %v58
    %v63 = vmul.f32 %v62, 0.6931472
    %v64 = vlog2.pop %v59
    %v65 = vmul.f32 %v64, 0.6931472
    %v66 = vmax.f32 %v63, -100.0
    %v67 = vmax.f32 %v65, -100.0
    %v68 = vsub.f32 0.0, %v58
    %v69 = vsub.f32 0.0, %v59
    %v70 = vadd.f32 %v68, 1.0
    %v71 = vlog2.pop %v70
    %v72 = vmul.f32 %v71, 0.6931472
    %v73 = vmul.f32 -0.5, %v68
    %v74 = vadd.f32 %v73, 1.0
    %v75 = vmul.f32 %v74, %v68
    %v76 = vand.u32 2147483647, %v68
    %vm77 = vcmp.lt.f32.partialorder %v76, 0.0004427343
    %v78 = vsel %vm77, %v75, %v72
    %v79 = vadd.f32 %v69, 1.0
    %v80 = vlog2.pop %v79
    %v81 = vmul.f32 %v80, 0.6931472
    %v82 = vmul.f32 -0.5, %v69
    %v83 = vadd.f32 %v82, 1.0
    %v84 = vmul.f32 %v83, %v69
    %v85 = vand.u32 2147483647, %v69
    %vm86 = vcmp.lt.f32.partialorder %v85, 0.0004427343
    %v87 = vsel %vm86, %v84, %v81
    %v88 = vmax.f32 %v78, -100.0
    %v89 = vmax.f32 %v87, -100.0
    %v90 = vsub.f32 %v66, %v88
    %v91 = vsub.f32 %v67, %v89
    %v92 = vmul.f32 %v60, %v90
    %v93 = vmul.f32 %v61, %v91
    %v94 = vadd.f32 %v88, %v92
    %v95 = vadd.f32 %v89, %v93
    %v96 = vadd.f32 %v94, %v95
    %v97 = vadd.f32 %v57, %v96
    %98 = vst [vmem:[#allocation7] sm:$0xff] %v97
    // Predicated region
    $region22: #{tpu_custom_call.1} parent=1 // pred_check
      _
    $region23: #{tpu_custom_call.1} parent=1 // pred_check_branch
      %100 = sbr.rel (0) target = $region25
    $region24: #{tpu_custom_call.1} parent=1 // pred_region
      %s102 = ssub.s32 128, 128
      %103 = vsyncadd [#allocation4], %s102
      %s105 = sshll.u32 [#allocation7], 4
      %s106 = int_to_ptr.vmem [resolvable:$true] %s105
      %108 = dma.vmem_to_hbm [thread:$0]  %s106, 128, %s2, [#allocation4]
    $region25: #{tpu_custom_call.1} parent=1 // pred_fallthru
      _
    // Predicated region
    $region26: #{tpu_custom_call.1} parent=1 // pred_check
      _
    $region27: #{tpu_custom_call.1} parent=1 // pred_check_branch
      %110 = sbr.rel (0) target = $region29
    $region28: #{tpu_custom_call.1} parent=1 // pred_region
      %111 = dma.done [#allocation4], 128
    $region29: #{tpu_custom_call.1} parent=1 // pred_fallthru
      _
    %112 = vsyncpa [#allocation3], 1
    %113 = vsyncpa [#allocation6], 1
    %114 = vsyncpa [#allocation4], 1

</llo_original>
